<compile_context>
chip_gen: v6e
topology: v6e:2x2x1
jax: 0.10.0
libtpu: 0.0.40
codegen_flags: <defaults>
</compile_context>

<pallas_src>
import functools

import jax
import jax.numpy as jnp
import numpy as np
from jax.experimental import pallas as pl
from jax.experimental.pallas import tpu as pltpu


def _round_up(x, m):
    return (x + m - 1) // m * m


def _softplus(x):
    # max(x,0) + log(1+exp(-|x|)); large-x behaviour exact, abs err vs
    # jax.nn.softplus < 1.5e-7 (well inside test tolerance).
    return jnp.maximum(x, 0.0) + jnp.log(1.0 + jnp.exp(-jnp.abs(x)))


def _encoder_kernel(x_ref, w_ref, b_ref, out_ref, *, latent_dim, out_pad):
    L = latent_dim
    x = x_ref[...]
    w = w_ref[...]
    if x.dtype != w.dtype:
        # In-kernel VPU cast: avoids a separate wrapper-side cast pass over the
        # feature (read f32 + write bf16 + re-read bf16) on the dominant stream.
        x = x.astype(w.dtype)
    # Linear on the MXU with f32 accumulation.  Weight columns are pre-permuted /
    # zero-padded so the kernel sees [mean_c0 (L) | mean_c1 (L) | logsigma (2L) | pad].
    y = jnp.dot(x, w, preferred_element_type=jnp.float32) + b_ref[...]

    m0 = y[:, 0 * L:1 * L]          # mean[..., l, 0]
    m1 = y[:, 1 * L:2 * L]          # mean[..., l, 1]
    z = y[:, 2 * L:4 * L]           # logsigma (original column order)

    # Lorentz (k=1) expmap0 of u = [0, m0, m1] followed by geoopt project().
    # Minkowski norm of u reduces to the Euclidean norm of (m0, m1) since u_time = 0.
    sq = m0 * m0 + m1 * m1
    sq_c = jnp.maximum(sq, 1e-8)
    inv_n = jax.lax.rsqrt(sq_c)            # 1/||m||  (single EUP rsqrt, no sqrt+div chain)
    nomin = sq_c * inv_n                   # ||m||
    # factor = sinh(||m||)/||m||.  Exp-based sinh cancels catastrophically for small
    # arguments; blend in a Taylor series below 0.1 (rel err < 1e-9 there).
    sinh_n = 0.5 * (jnp.exp(nomin) - jnp.exp(-nomin))
    factor = jnp.where(
        nomin < 0.1,
        1.0 + sq_c * (1.0 / 6.0 + sq_c * (1.0 / 120.0)),
        sinh_n * inv_n,
    )
    rx = factor * m0
    ry = factor * m1
    # project(): recompute time coordinate as sqrt(k + ||spatial||^2), k = 1.
    # (Like the reference, exp/sinh still overflow for ||m|| >~ 88 in f32.)
    time = jnp.sqrt(1.0 + rx * rx + ry * ry)

    sig = _softplus(z)

    # Build the whole [time | x | y | sigma | pad] slab in registers and issue a
    # single store — no zero-init pass, no narrow masked slab writes.
    parts = [time, rx, ry, sig]
    if out_pad:
        parts.append(jnp.zeros((time.shape[0], out_pad), jnp.float32))
    out_ref[...] = jnp.concatenate(parts, axis=-1)


def prepare_encoder_params(weight, bias, latent_dim, matmul_dtype=jnp.bfloat16):
    """One-time glue (hoisted out of the per-call path).

    weight: (4L, F) torch Linear layout; bias: (4L,).
    Returns (w_p, b_p): weight transposed to (F, N_pad) with output columns permuted
    so the two mean components are contiguous slabs, zero-padded to a multiple of
    128 lanes and cast to `matmul_dtype`; bias permuted/padded, kept f32 (it is
    added to the f32 MXU accumulator inside the kernel).

    bf16 operands are the default (the kernel is HBM-bound and the v6e/v7x MXU is
    bf16-native); pass matmul_dtype=jnp.float32 for a full-accuracy mode.
    """
    L = latent_dim
    out_features, _ = weight.shape
    assert out_features == 4 * L
    n_pad = _round_up(max(4 * L, 128), 128)
    perm = np.concatenate(
        [np.arange(0, 2 * L, 2), np.arange(1, 2 * L, 2), np.arange(2 * L, 4 * L)]
    )
    w_p = jnp.asarray(weight).T[:, perm]                     # (F, 4L)
    b_p = jnp.asarray(bias)[perm]                            # (4L,)
    if n_pad > 4 * L:
        w_p = jnp.pad(w_p, ((0, 0), (0, n_pad - 4 * L)))
        b_p = jnp.pad(b_p, (0, n_pad - 4 * L))
    return w_p.astype(matmul_dtype), b_p.reshape(1, n_pad).astype(jnp.float32)


def _tpu_vmem_capacity_bytes():
    try:
        cap = int(getattr(pltpu.get_tpu_info(), "vmem_capacity_bytes"))
        if cap > 0:
            return cap
    except Exception:
        pass
    return 64 * 1024 * 1024  # conservative default (v7x per-TensorCore VMEM)


@functools.partial(jax.jit, static_argnames=("latent_dim",))
def vanilla_encoder_layer(feature, w_p, b_p, latent_dim):
    """feature: (B, F) (f32 or bf16); (w_p, b_p) from prepare_encoder_params.

    Returns (mean, sigma) with shapes (B, L, 3) and (B, L, 2), matching the
    PyTorch VanillaEncoderLayer.forward.
    """
    B, Fdim = feature.shape
    L = latent_dim
    n_pad = w_p.shape[1]

    # Output slab layout [time | x | y | sigma]. Below one vreg lane-width keep it
    # exactly 5L wide (full-dim block, legal) so we don't stream 128/5L x the
    # writeback bytes; at >= 128 stay on lane-dense 128-multiples (unmasked vst).
    out_n = 5 * L if 5 * L < 128 else _round_up(max(5 * L, 128), 128)
    out_pad = out_n - 5 * L

    w_bytes = jnp.dtype(w_p.dtype).itemsize
    x_bytes = jnp.dtype(feature.dtype).itemsize

    # Generation-aware VMEM budgets: v5e/v6e have 128 MiB per core, v7x 64 MiB.
    vmem_cap = _tpu_vmem_capacity_bytes()
    if vmem_cap >= 100 * 1024 * 1024:        # v5e / v6e
        stream_budget = 64 * 1024 * 1024
        vmem_limit_cap = 100 * 1024 * 1024
    else:                                    # v7x
        stream_budget = 24 * 1024 * 1024
        vmem_limit_cap = 52 * 1024 * 1024

    # Resident weight + bias, counted at their real buffer count (default 2x).
    resident = 2 * (Fdim * n_pad * w_bytes + n_pad * 4)

    # bf16 matmul operands pack 2 rows/sublane -> use 16-row batch granules; f32 -> 8.
    sub = 16 if (w_bytes < 4 or x_bytes < 4) else 8
    b_ceil = _round_up(max(B, sub), sub)

    # Keep >= ~4 grid steps when the batch allows it: double-buffered DMA overlap
    # plus at least 2 steps per TensorCore for v7x dual-TC ("parallel") sharding.
    step_cap = max(sub, _round_up(-(-b_ceil // 4), sub))
    waste_cap = max(b_ceil, int(1.10 * B) + sub)   # bound zero-row padding to ~10%

    def _stream_need(tb):
        return resident + 2 * tb * Fdim * x_bytes + 2 * tb * out_n * 4

    tile_b = sub
    for cand in (2048, 1024, 512, 256, 128, 64, 32, 16, 8):
        if cand < sub or cand % sub or cand > step_cap:
            continue
        if _round_up(B, cand) > waste_cap:
            continue
        if _stream_need(cand) <= stream_budget:
            tile_b = cand
            break

    min_need = _stream_need(tile_b)
    if min_need > vmem_limit_cap:
        raise ValueError(
            f"VanillaEncoderLayer Pallas kernel does not fit VMEM: needs "
            f"{min_need} bytes at the minimal batch tile (feature_dim={Fdim}, "
            f"latent_dim={L}) vs limit {vmem_limit_cap}. Add a K-axis grid "
            f"(tk=256) with an accumulator for this feature_dim.")

    b_pad = _round_up(B, tile_b)
    x = feature if b_pad == B else jnp.pad(feature, ((0, b_pad - B), (0, 0)))

    vmem_limit = int(min(max(2 * min_need, 16 * 1024 * 1024), vmem_limit_cap))

    out = pl.pallas_call(
        functools.partial(_encoder_kernel, latent_dim=L, out_pad=out_pad),
        out_shape=jax.ShapeDtypeStruct((b_pad, out_n), jnp.float32),
        grid_spec=pltpu.PrefetchScalarGridSpec(
            num_scalar_prefetch=0,
            grid=(b_pad // tile_b,),
            in_specs=[
                pl.BlockSpec((tile_b, Fdim), lambda i: (i, 0)),   # stream batch tiles
                pl.BlockSpec((Fdim, n_pad), lambda i: (0, 0)),    # weight stays resident
                pl.BlockSpec((1, n_pad), lambda i: (0, 0)),       # bias stays resident
            ],
            out_specs=pl.BlockSpec((tile_b, out_n), lambda i: (i, 0)),
        ),
        compiler_params=pltpu.CompilerParams(
            dimension_semantics=("parallel",),   # independent batch tiles (2 TCs on v7x)
            vmem_limit_bytes=vmem_limit,
        ),
    )(x, w_p, b_p)

    out = out[:B]
    mean = jnp.stack([out[:, :L], out[:, L:2 * L], out[:, 2 * L:3 * L]], axis=-1)  # (B,L,3)
    sigma = out[:, 3 * L:5 * L].reshape(B, L, 2)                                    # (B,L,2)
    return mean, sigma


def _reference(feature, weight, bias, latent_dim, matmul_dtype=jnp.float32):
    # pure-JAX reference reproducing the PyTorch / geoopt math
    L = latent_dim
    y = jnp.dot(feature.astype(matmul_dtype), weight.T.astype(matmul_dtype),
                preferred_element_type=jnp.float32) + bias
    mean = y[:, : 2 * L].reshape(feature.shape[0], L, 2)
    logsigma = y[:, 2 * L:]
    u = jnp.pad(mean, ((0, 0), (0, 0), (1, 0)))                     # F.pad(mean, (1, 0))
    inner = -u[..., :1] ** 2 + jnp.sum(u[..., 1:] ** 2, -1, keepdims=True)
    nomin = jnp.sqrt(jnp.maximum(inner, 1e-8))
    r_v = jnp.sinh(nomin) * u / nomin
    spatial = r_v[..., 1:]
    time = jnp.sqrt(1.0 + jnp.sum(spatial ** 2, -1, keepdims=True))  # project()
    mean_out = jnp.concatenate([time, spatial], axis=-1)
    sigma = jax.nn.softplus(logsigma).reshape(feature.shape[0], L, 2)
    return mean_out, sigma


if __name__ == "__main__":
    B, feature_dim, latent_dim = 2, 32, 8

    key = jax.random.PRNGKey(0)
    k_x, k_w, k_b = jax.random.split(key, 3)
    bound = 1.0 / (feature_dim ** 0.5)
    feature = jax.random.normal(k_x, (B, feature_dim), dtype=jnp.float32)
    weight = jax.random.uniform(
        k_w, (4 * latent_dim, feature_dim), minval=-bound, maxval=bound, dtype=jnp.float32
    )
    bias = jax.random.uniform(
        k_b, (4 * latent_dim,), minval=-bound, maxval=bound, dtype=jnp.float32
    )

    # f32 accuracy mode: exact check against the pure-JAX reference.
    w_p, b_p = prepare_encoder_params(weight, bias, latent_dim, matmul_dtype=jnp.float32)
    mean, sigma = vanilla_encoder_layer(feature, w_p, b_p, latent_dim)
    jax.block_until_ready((mean, sigma))
    mean_ref, sigma_ref = _reference(feature, weight, bias, latent_dim)
    assert mean.shape == (B, latent_dim, 3) and sigma.shape == (B, latent_dim, 2)
    assert jnp.allclose(mean, mean_ref, atol=1e-5, rtol=1e-5)
    assert jnp.allclose(sigma, sigma_ref, atol=1e-5, rtol=1e-5)

    # Production default: bf16 matmul operands (feature cast to bf16 *inside* the
    # kernel; epilogue stays f32). Compared against a reference using the same
    # bf16-cast operands.
    w_bf, b_bf = prepare_encoder_params(weight, bias, latent_dim)
    mean_bf, sigma_bf = vanilla_encoder_layer(feature, w_bf, b_bf, latent_dim)
    jax.block_until_ready((mean_bf, sigma_bf))
    mean_bref, sigma_bref = _reference(feature, weight, bias, latent_dim,
                                       matmul_dtype=jnp.bfloat16)
    assert jnp.allclose(mean_bf, mean_bref, atol=1e-3, rtol=1e-3)
    assert jnp.allclose(sigma_bf, sigma_bref, atol=1e-3, rtol=1e-3)

    print("KERNEL_OK")
</pallas_src>

<mosaic_0001>
module attributes {stable_mosaic.version = 11 : i64} {
  func.func @_encoder_kernel(%arg0: i32, %arg1: memref<8x32xf32, #tpu.memory_space<vmem>>, %arg2: memref<32x128xf32, #tpu.memory_space<vmem>>, %arg3: memref<1x128xf32, #tpu.memory_space<vmem>>, %arg4: memref<8x40xf32, #tpu.memory_space<vmem>>) attributes {dimension_semantics = [#tpu.dimension_semantics<parallel>], iteration_bounds = array<i64: 1>, scalar_prefetch = 0 : i64, scratch_operands = 0 : i64, tpu.core_type = #tpu.core_type<tc>, window_params = [{transform_indices = @transform_0, window_bounds = array<i64: 8, 32>}, {pipeline_mode = #tpu.pipeline_mode<synchronous>, transform_indices = @transform_1, window_bounds = array<i64: 32, 128>}, {pipeline_mode = #tpu.pipeline_mode<synchronous>, transform_indices = @transform_2, window_bounds = array<i64: 1, 128>}, {transform_indices = @transform_3, window_bounds = array<i64: 8, 40>}]} {
    %c0 = arith.constant 0 : index
    %c0_0 = arith.constant 0 : index
    %0 = vector.load %arg1[%c0, %c0_0] : memref<8x32xf32, #tpu.memory_space<vmem>>, vector<8x32xf32>
    %c0_1 = arith.constant 0 : index
    %c0_2 = arith.constant 0 : index
    %1 = vector.load %arg2[%c0_1, %c0_2] : memref<32x128xf32, #tpu.memory_space<vmem>>, vector<32x128xf32>
    %cst = arith.constant dense<0.000000e+00> : vector<8x128xf32>
    %2 = tpu.matmul %0, %1, %cst {dimension_numbers = #tpu.dot_dimension_numbers<[1], [0], [0], [1], [0, 0, 1, 1], [], []>} : vector<8x32xf32>, vector<32x128xf32>, vector<8x128xf32> -> vector<8x128xf32>
    %c0_3 = arith.constant 0 : index
    %c0_4 = arith.constant 0 : index
    %3 = vector.load %arg3[%c0_3, %c0_4] : memref<1x128xf32, #tpu.memory_space<vmem>>, vector<1x128xf32>
    %4 = vector.broadcast %3 : vector<1x128xf32> to vector<8x128xf32>
    %5 = arith.addf %2, %4 : vector<8x128xf32>
    %6 = vector.extract_strided_slice %5 {offsets = [0, 0], sizes = [8, 8], strides = [1, 1]} : vector<8x128xf32> to vector<8x8xf32>
    %7 = vector.extract_strided_slice %5 {offsets = [0, 8], sizes = [8, 8], strides = [1, 1]} : vector<8x128xf32> to vector<8x8xf32>
    %8 = vector.extract_strided_slice %5 {offsets = [0, 16], sizes = [8, 16], strides = [1, 1]} : vector<8x128xf32> to vector<8x16xf32>
    %9 = arith.mulf %6, %6 : vector<8x8xf32>
    %10 = arith.mulf %7, %7 : vector<8x8xf32>
    %11 = arith.addf %9, %10 : vector<8x8xf32>
    %cst_5 = arith.constant 9.99999993E-9 : f32
    %12 = vector.broadcast %cst_5 : f32 to vector<8x8xf32>
    %13 = arith.maximumf %11, %12 : vector<8x8xf32>
    %14 = math.rsqrt %13 : vector<8x8xf32>
    %15 = arith.mulf %13, %14 : vector<8x8xf32>
    %16 = math.exp %15 : vector<8x8xf32>
    %cst_6 = arith.constant 0.000000e+00 : f32
    %17 = vector.broadcast %cst_6 : f32 to vector<8x8xf32>
    %18 = arith.subf %17, %15 : vector<8x8xf32>
    %19 = math.exp %18 : vector<8x8xf32>
    %20 = arith.subf %16, %19 : vector<8x8xf32>
    %cst_7 = arith.constant 5.000000e-01 : f32
    %21 = vector.broadcast %cst_7 : f32 to vector<8x8xf32>
    %22 = arith.mulf %21, %20 : vector<8x8xf32>
    %cst_8 = arith.constant 1.000000e-01 : f32
    %23 = vector.broadcast %cst_8 : f32 to vector<8x8xf32>
    %24 = arith.cmpf olt, %15, %23 : vector<8x8xf32>
    %cst_9 = arith.constant 0.00833333377 : f32
    %25 = vector.broadcast %cst_9 : f32 to vector<8x8xf32>
    %26 = arith.mulf %13, %25 : vector<8x8xf32>
    %cst_10 = arith.constant 0.166666672 : f32
    %27 = vector.broadcast %cst_10 : f32 to vector<8x8xf32>
    %28 = arith.addf %27, %26 : vector<8x8xf32>
    %29 = arith.mulf %13, %28 : vector<8x8xf32>
    %cst_11 = arith.constant 1.000000e+00 : f32
    %30 = vector.broadcast %cst_11 : f32 to vector<8x8xf32>
    %31 = arith.addf %30, %29 : vector<8x8xf32>
    %32 = arith.mulf %22, %14 : vector<8x8xf32>
    %33 = arith.select %24, %31, %32 : vector<8x8xi1>, vector<8x8xf32>
    %34 = arith.mulf %33, %6 : vector<8x8xf32>
    %35 = arith.mulf %33, %7 : vector<8x8xf32>
    %36 = arith.mulf %34, %34 : vector<8x8xf32>
    %cst_12 = arith.constant 1.000000e+00 : f32
    %37 = vector.broadcast %cst_12 : f32 to vector<8x8xf32>
    %38 = arith.addf %37, %36 : vector<8x8xf32>
    %39 = arith.mulf %35, %35 : vector<8x8xf32>
    %40 = arith.addf %38, %39 : vector<8x8xf32>
    %41 = math.sqrt %40 : vector<8x8xf32>
    %cst_13 = arith.constant 0.000000e+00 : f32
    %42 = vector.broadcast %cst_13 : f32 to vector<8x16xf32>
    %43 = arith.maximumf %8, %42 : vector<8x16xf32>
    %44 = math.absf %8 : vector<8x16xf32>
    %cst_14 = arith.constant 0.000000e+00 : f32
    %45 = vector.broadcast %cst_14 : f32 to vector<8x16xf32>
    %46 = arith.subf %45, %44 : vector<8x16xf32>
    %47 = math.exp %46 : vector<8x16xf32>
    %cst_15 = arith.constant 1.000000e+00 : f32
    %48 = vector.broadcast %cst_15 : f32 to vector<8x16xf32>
    %49 = arith.addf %48, %47 : vector<8x16xf32>
    %50 = math.log %49 : vector<8x16xf32>
    %51 = arith.addf %43, %50 : vector<8x16xf32>
    %52 = tpu.concatenate %41, %34, %35, %51 in 1 : vector<8x8xf32>, vector<8x8xf32>, vector<8x8xf32>, vector<8x16xf32> -> vector<8x40xf32>
    %c0_16 = arith.constant 0 : index
    %c0_17 = arith.constant 0 : index
    %53 = vector.load %arg4[%c0_16, %c0_17] : memref<8x40xf32, #tpu.memory_space<vmem>>, vector<8x40xf32>
    tpu.vector_store %arg4[%c0_16, %c0_17], %52 {strides = array<i32>} : memref<8x40xf32, #tpu.memory_space<vmem>>, vector<8x40xf32>,
    return
  }
  func.func @transform_0(%arg0: i32) -> (i32, i32) {
    %c0_i32 = arith.constant 0 : i32
    %c0_i32_0 = arith.constant 0 : i32
    return %arg0, %c0_i32 : i32, i32
  }
  func.func @transform_1(%arg0: i32) -> (i32, i32) {
    %c0_i32 = arith.constant 0 : i32
    %c0_i32_0 = arith.constant 0 : i32
    %c0_i32_1 = arith.constant 0 : i32
    return %c0_i32, %c0_i32_0 : i32, i32
  }
  func.func @transform_2(%arg0: i32) -> (i32, i32) {
    %c0_i32 = arith.constant 0 : i32
    %c0_i32_0 = arith.constant 0 : i32
    %c0_i32_1 = arith.constant 0 : i32
    return %c0_i32, %c0_i32_0 : i32, i32
  }
  func.func @transform_3(%arg0: i32) -> (i32, i32) {
    %c0_i32 = arith.constant 0 : i32
    %c0_i32_0 = arith.constant 0 : i32
    return %arg0, %c0_i32 : i32, i32
  }
}

</mosaic_0001>

<llo_original>
// kernel: vanilla_encoder_layer.1
$region0: #{vanilla_encoder_layer.1}
  #allocation0 [shape = 'u32[]', space=smem, size = 0x4, offset = 0x4, fixed_abs, tag = 'smem constant byte address 0x4 - core index']
  #allocation1 [shape = 'u32[144,128]{1,0:T(1,128)}', space=vmem, size = 0x12000, scoped, tag = 'internal scratch']
  %s0 = inlined_call_operand.vmem [shape: f32[8,32], index: 0, kind: input, shape index: {}]
  %s1 = inlined_call_operand.hbm [shape: f32[32,128], index: 1, kind: input, shape index: {}]
  %s2 = inlined_call_operand.vmem [shape: f32[1,128], index: 2, kind: input, shape index: {}]
  %s3 = inlined_call_operand.vmem [shape: f32[8,40], index: 3, kind: output, shape index: {}]
  %s4 = sld [smem:[#allocation0]]
  $region26: #{vanilla_encoder_layer.1} parent=0
    _
  %s6 = ssub.s32 1, %s4
  %s7 = scalar_select 0, %s6, %s4
  $region1: #{vanilla_encoder_layer.1} parent=0
    #allocation2 [shape = 'u8[16384]{0}', space=vmem, size = 0x4000, scoped, tag = 'input window, operand 1, single buffered']
    #allocation3 [shape = 's32[1]{0}', space=sflag, size = 0x4, scoped, tag = 'scoped memory for vanilla_encoder_layer.1']
    %8 = vsyncpa [#allocation3], 0
    // Predicated region
    $region2: #{vanilla_encoder_layer.1} parent=1 // pred_check
      _
    $region3: #{vanilla_encoder_layer.1} parent=1 // pred_check_branch
      %10 = sbr.rel (0) target = $region5
    $region4: #{vanilla_encoder_layer.1} parent=1 // pred_region
      _
    $region5: #{vanilla_encoder_layer.1} parent=1 // pred_fallthru
      _
    // Predicated region
    $region6: #{vanilla_encoder_layer.1} parent=1 // pred_check
      _
    $region7: #{vanilla_encoder_layer.1} parent=1 // pred_check_branch
      %12 = sbr.rel (0) target = $region9
    $region8: #{vanilla_encoder_layer.1} parent=1 // pred_region
      %s14 = ssub.s32 512, 512
      %15 = vsyncadd [#allocation3], %s14
      %s16 = sshll.u32 [#allocation2], 4
      %s17 = int_to_ptr.vmem [resolvable:$true] %s16
      %22 = dma.hbm_to_vmem [thread:$0]  %s1, 512, %s17, [#allocation3], 128, 128, 8
    $region9: #{vanilla_encoder_layer.1} parent=1 // pred_fallthru
      _
    // Predicated region
    $region10: #{vanilla_encoder_layer.1} parent=1 // pred_check
      _
    $region11: #{vanilla_encoder_layer.1} parent=1 // pred_check_branch
      %24 = sbr.rel (0) target = $region13
    $region12: #{vanilla_encoder_layer.1} parent=1 // pred_region
      _
    $region13: #{vanilla_encoder_layer.1} parent=1 // pred_fallthru
      _
    // Predicated region
    $region14: #{vanilla_encoder_layer.1} parent=1 // pred_check
      _
    $region15: #{vanilla_encoder_layer.1} parent=1 // pred_check_branch
      %26 = sbr.rel (0) target = $region17
    $region16: #{vanilla_encoder_layer.1} parent=1 // pred_region
      %27 = dma.done [#allocation3], 512
    $region17: #{vanilla_encoder_layer.1} parent=1 // pred_fallthru
      _
    %v28 = vld [vmem:[%s0] sm:$0xff]
    %v29 = vld [vmem:[#allocation2] sm:$0xff]
    %v30 = vld [vmem:[#allocation2 + $0x8] sm:$0xff]
    %v31 = vld [vmem:[#allocation2 + $0x10] sm:$0xff]
    %v32 = vld [vmem:[#allocation2 + $0x18] sm:$0xff]
    %v33 = vld [vmem:[%s2] sm:$0x1]
    %v35 = vlaneseq
    %v36 = vshrl.u32 %v35, 7
    %v37 = vsub.s32 0, %v36
    %v38 = vrot.slane %v33, %v37
    %vm40 = vcmask 261120
    %v42 = vsel %vm40, %v28, 0
    %44 = vmatprep.subr.mxu0 0.0
    %45 = vmatpush1.msra.mxu0 0.0
    %46 = vmatprep.subr.mxu0 0.0
    %47 = vmatpush1.msra.mxu0 0.0
    %48 = vmatprep.subr.mxu0 0.0
    %49 = vmatpush1.msra.mxu0 0.0
    %50 = vmatprep.subr.mxu0 0.0
    %51 = vmatpush1.msra.mxu0 0.0
    %52 = vmatprep.subr.mxu0 0.0
    %53 = vmatpush1.msra.mxu0 0.0
    %54 = vmatprep.subr.mxu0 0.0
    %55 = vmatpush1.msra.mxu0 0.0
    %56 = vmatprep.subr.mxu0 0.0
    %57 = vmatpush1.msra.mxu0 0.0
    %58 = vmatprep.subr.mxu0 0.0
    %59 = vmatpush1.msra.mxu0 0.0
    %60 = vmatprep.subr.mxu0 0.0
    %61 = vmatpush1.msra.mxu0 0.0
    %62 = vmatprep.subr.mxu0 0.0
    %63 = vmatpush1.msra.mxu0 0.0
    %64 = vmatprep.subr.mxu0 0.0
    %65 = vmatpush1.msra.mxu0 0.0
    %66 = vmatprep.subr.mxu0 0.0
    %67 = vmatpush1.msra.mxu0 0.0
    %68 = vmatprep.subr.mxu0 0.0
    %69 = vmatpush1.msra.mxu0 %v32
    %70 = vmatprep.subr.mxu0 0.0
    %71 = vmatpush1.msra.mxu0 %v31
    %72 = vmatprep.subr.mxu0 0.0
    %73 = vmatpush1.msra.mxu0 %v30
    %74 = vmatprep.subr.mxu0 0.0
    %75 = vmatpush1.msra.mxu0 %v29
    %76 = vmatprep.subr.mxu0 0.0
    %77 = vmatpush2.msra.mxu0 0.0
    %78 = vmatprep.subr.mxu0 0.0
    %79 = vmatpush2.msra.mxu0 0.0
    %80 = vmatprep.subr.mxu0 0.0
    %81 = vmatpush2.msra.mxu0 0.0
    %82 = vmatprep.subr.mxu0 0.0
    %83 = vmatpush2.msra.mxu0 0.0
    %84 = vmatprep.subr.mxu0 0.0
    %85 = vmatpush2.msra.mxu0 0.0
    %86 = vmatprep.subr.mxu0 0.0
    %87 = vmatpush2.msra.mxu0 0.0
    %88 = vmatprep.subr.mxu0 0.0
    %89 = vmatpush2.msra.mxu0 0.0
    %90 = vmatprep.subr.mxu0 0.0
    %91 = vmatpush2.msra.mxu0 0.0
    %92 = vmatprep.subr.mxu0 0.0
    %93 = vmatpush2.msra.mxu0 0.0
    %94 = vmatprep.subr.mxu0 0.0
    %95 = vmatpush2.msra.mxu0 0.0
    %96 = vmatprep.subr.mxu0 0.0
    %97 = vmatpush2.msra.mxu0 0.0
    %98 = vmatprep.subr.mxu0 0.0
    %99 = vmatpush2.msra.mxu0 0.0
    %100 = vmatprep.subr.mxu0 0.0
    %101 = vmatpush2.msra.mxu0 0.0
    %102 = vmatprep.subr.mxu0 0.0
    %103 = vmatpush2.msra.mxu0 0.0
    %104 = vmatprep.subr.mxu0 0.0
    %105 = vmatpush2.msra.mxu0 0.0
    %106 = vmatprep.subr.mxu0 0.0
    %107 = vmatpush2.msra.mxu0 0.0
    %108 = vmatprep.mubr.f32.mxu0 0.0
    %109 = vmatmul.mubr.f32.gmra.mxu0 %v42
    %v110 = vpop.f32.mrf.mxu0
    %v111 = vadd.f32 %v38, %v110
    %v112 = vpop.f32.mrf.mxu0
    %113 = vdwg.mxu0
    %v114 = vmul.f32 %v111, %v111
    %116 = vrot.lane.b32.xlu0 %v114, 120
    %v117 = vpop.permute.xlu0 %116
    %v119 = vadd.f32 %v114, %v117
    %v120 = vmax.f32 %v119, 1e-08
    %v121 = vrsqrt.pop %v120
    %v122 = vmul.f32 %v120, %v121
    %v123 = vmul.f32 %v122, 1.442695
    %v124 = vpow.pop %v123
    %v125 = vsub.f32 0.0, %v122
    %v126 = vmul.f32 %v125, 1.442695
    %v127 = vpow.pop %v126
    %v128 = vsub.f32 %v124, %v127
    %v129 = vmul.f32 %v128, 0.5
    %vm130 = vcmp.lt.f32.partialorder %v122, 0.1
    %v131 = vmul.f32 %v120, 0.008333334
    %v132 = vadd.f32 %v131, 0.16666667
    %v133 = vmul.f32 %v120, %v132
    %v134 = vadd.f32 %v133, 1.0
    %v135 = vmul.f32 %v129, %v121
    %v136 = vsel %vm130, %v134, %v135
    %v137 = vmul.f32 %v136, %v111
    %139 = vrot.lane.b32.xlu0 %v111, 120
    %v140 = vpop.permute.xlu0 %139
    %v142 = vmul.f32 %v136, %v140
    %v143 = vmul.f32 %v137, %v137
    %v144 = vadd.f32 %v143, 1.0
    %v145 = vmul.f32 %v142, %v142
    %v146 = vadd.f32 %v144, %v145
    %v147 = vrsqrt.pop %v146
    %v148 = vmul.f32 %v146, %v147
    %vm149 = vcmp.eq.f32.partialorder %v146, inf
    %v150 = vsel %vm149, %v146, %v148
    %vm151 = vcmp.eq.f32.partialorder %v146, 0.0
    %v152 = vand.u32 %v146, 2147483648
    %v153 = vsel %vm151, %v152, %v150
    %v154 = vmax.f32 %v111, 0.0
    %v155 = vand.u32 2147483647, %v111
    %v156 = vsub.f32 0.0, %v155
    %v157 = vmul.f32 %v156, 1.442695
    %v158 = vpow.pop %v157
    %v159 = vadd.f32 %v158, 1.0
    %v160 = vlog2.pop %v159
    %v161 = vmul.f32 %v160, 0.6931472
    %v162 = vadd.f32 %v154, %v161
    %164 = vrot.lane.b32.xlu0 %v137, 8
    %v165 = vpop.permute.xlu0 %164
    %168 = vrot.lane.b32.xlu0 %v142, 16
    %v169 = vpop.permute.xlu0 %168
    %172 = vrot.lane.b32.xlu0 %v162, 8
    %v173 = vpop.permute.xlu0 %172
    %vm175 = vcmask 64512
    %v176 = vsel %vm175, %v153, %v165
    %vm177 = vcmask 130048
    %v178 = vsel %vm177, %v176, %v169
    %vm179 = vcmask 195584
    %v180 = vsel %vm179, %v178, %v173
    %vm181 = vcmask 326656
    %182 = vst.msk [vmem:[%s3] sm:$0xff] %vm181, %v180
    // Predicated region
    $region18: #{vanilla_encoder_layer.1} parent=1 // pred_check
      _
    $region19: #{vanilla_encoder_layer.1} parent=1 // pred_check_branch
      %184 = sbr.rel (0) target = $region21
    $region20: #{vanilla_encoder_layer.1} parent=1 // pred_region
      _
    $region21: #{vanilla_encoder_layer.1} parent=1 // pred_fallthru
      _
    // Predicated region
    $region22: #{vanilla_encoder_layer.1} parent=1 // pred_check
      _
    $region23: #{vanilla_encoder_layer.1} parent=1 // pred_check_branch
      %186 = sbr.rel (0) target = $region25
    $region24: #{vanilla_encoder_layer.1} parent=1 // pred_region
      _
    $region25: #{vanilla_encoder_layer.1} parent=1 // pred_fallthru
      _
    %187 = vsyncpa [#allocation3], 1

</llo_original>
